<compile_context>
chip_gen: v6e
topology: v6e:2x2x1
jax: 0.10.0
libtpu: 0.0.40
codegen_flags: <defaults>
</compile_context>

<pallas_src>
import jax
import jax.numpy as jnp
from jax import lax
from jax.experimental import pallas as pl
from jax.experimental.pallas import tpu as pltpu

_LANE = 128


def _gemv_out1_kernel(x_ref, w_ref, b_ref, o_ref):
    # x: (TB, IN)  w: (1, IN)  b: (1, 1) in SMEM  o: (1, TB) lane-dense.
    # N=1 "matmul" routed to VPU multiply + narrow lane reduce (IN lanes),
    # result stored with batch in the lane dimension (unmasked when TB%128==0).
    y = jnp.sum(x_ref[...] * w_ref[...], axis=-1) + b_ref[0, 0]      # (TB,)
    o_ref[...] = y[None, :].astype(o_ref.dtype)                      # (1, TB)


def _gemm_kernel(x_ref, w_ref, b_ref, o_ref):
    # General output width: single MXU matmul with f32 accumulation.
    y = jnp.dot(x_ref[...], w_ref[...],
                preferred_element_type=jnp.float32) + b_ref[...]
    o_ref[...] = y.astype(o_ref.dtype)


def _pick_tile(B, in_features, block_b):
    """Batch tile: biggest hardware-friendly tile that fits scoped VMEM."""
    if B <= block_b:
        return B                                   # single block == full array
    # Multiple of 128 -> (8,128)-compliant x blocks and unmasked (1, tb) stores.
    tb = max(_LANE, (block_b // _LANE) * _LANE)
    # Keep double-buffered x (2 * tb * in * 4B) under ~8 MiB so it fits the
    # v5e 16 MiB default scoped-VMEM (v6e 32 MiB, v7x 32 MiB) with headroom.
    cap_rows = (8 << 20) // (2 * 4 * max(in_features, 1))
    if cap_rows >= _LANE:
        tb = min(tb, (cap_rows // _LANE) * _LANE)
    # Prefer >= 4 grid steps so both v7x TensorCores get >= 2 pipelined tiles.
    if pl.cdiv(B, tb) < 4 and tb >= 2 * _LANE:
        tb = min(tb, max(_LANE, (pl.cdiv(B, 4) // _LANE) * _LANE))
    return max(_LANE, (tb // _LANE) * _LANE)


def nn_forward(x, w1, b1, w2, b2, *, block_b=4096):
    """Forward pass of NN.  x: [B, in], w1: [in, 40], b1: [1, 40],
    w2: [40, out], b2: [1, out].  Returns [B, out]."""
    B, in_features = x.shape
    out_features = w2.shape[1]

    # Exact algebraic fold of the two linear layers (no activation between).
    f32 = jnp.float32
    hi = lax.Precision.HIGHEST
    w_eff = jnp.dot(w1.astype(f32), w2.astype(f32),
                    precision=hi, preferred_element_type=f32).astype(x.dtype)
    b_eff = (jnp.dot(b1.astype(f32), w2.astype(f32),
                     precision=hi, preferred_element_type=f32)
             + b2.astype(f32)).astype(x.dtype)

    tb = _pick_tile(B, in_features, block_b)
    grid = (pl.cdiv(B, tb),)

    vmem = pltpu.MemorySpace.VMEM
    x_spec = pl.BlockSpec((tb, in_features), lambda i: (i, 0), memory_space=vmem)

    flops = 2 * B * in_features * out_features
    bytes_accessed = 4 * (x.size + w_eff.size + b_eff.size + B * out_features)
    cost = pl.CostEstimate(flops=flops, transcendentals=0,
                           bytes_accessed=bytes_accessed)
    cparams = pltpu.CompilerParams(dimension_semantics=("parallel",))

    if out_features == 1:
        y_t = pl.pallas_call(
            _gemv_out1_kernel,
            out_shape=jax.ShapeDtypeStruct((1, B), x.dtype),
            grid=grid,
            in_specs=[
                x_spec,
                pl.BlockSpec((1, in_features), lambda i: (0, 0),
                             memory_space=vmem),
                pl.BlockSpec(memory_space=pltpu.MemorySpace.SMEM),   # b_eff scalar
            ],
            out_specs=pl.BlockSpec((1, tb), lambda i: (0, i), memory_space=vmem),
            compiler_params=cparams,
            cost_estimate=cost,
        )(x, w_eff.reshape(1, in_features), b_eff)
        return y_t.T                                 # (B, 1) — layout plumbing only

    # out_features > 1: one MXU matmul.  (tb, out) output layout kept knowingly:
    # output writeback is a tiny fraction of traffic for this mem-bound kernel.
    return pl.pallas_call(
        _gemm_kernel,
        out_shape=jax.ShapeDtypeStruct((B, out_features), x.dtype),
        grid=grid,
        in_specs=[
            x_spec,
            pl.BlockSpec((in_features, out_features), lambda i: (0, 0),
                         memory_space=vmem),
            pl.BlockSpec((1, out_features), lambda i: (0, 0),
                         memory_space=vmem),
        ],
        out_specs=pl.BlockSpec((tb, out_features), lambda i: (i, 0),
                               memory_space=vmem),
        compiler_params=cparams,
        cost_estimate=cost,
    )(x, w_eff, b_eff)


def init_params(key, input_size, hidden=40, output_size=1, dtype=jnp.float32):
    # Mimics PyTorch nn.Linear default init: U(-1/sqrt(fan_in), 1/sqrt(fan_in)).
    k1, k2, k3, k4 = jax.random.split(key, 4)
    bound1 = 1.0 / (input_size ** 0.5)
    bound2 = 1.0 / (hidden ** 0.5)
    w1 = jax.random.uniform(k1, (input_size, hidden), dtype, -bound1, bound1)
    b1 = jax.random.uniform(k2, (1, hidden), dtype, -bound1, bound1)
    w2 = jax.random.uniform(k3, (hidden, output_size), dtype, -bound2, bound2)
    b2 = jax.random.uniform(k4, (1, output_size), dtype, -bound2, bound2)
    return w1, b1, w2, b2


def _reference(x, w1, b1, w2, b2):
    return (x @ w1 + b1) @ w2 + b2


if __name__ == "__main__":
    key = jax.random.PRNGKey(0)
    kx, kx2, kp = jax.random.split(key, 3)

    batch = 8
    input_size = 32
    output_size = 1

    x = jax.random.normal(kx, (batch, input_size), jnp.float32)
    w1, b1, w2, b2 = init_params(kp, input_size, hidden=40,
                                 output_size=output_size)

    # Primary path (output_size == 1, folded affine, lane-dense output).
    y = nn_forward(x, w1, b1, w2, b2)
    jax.block_until_ready(y)
    y_ref = _reference(x, w1, b1, w2, b2)
    assert y.shape == (batch, output_size)
    assert jnp.allclose(y, y_ref, atol=2e-5, rtol=1e-5)

    # Multi-tile path (grid > 1, partial trailing tile, tb rounded to 128).
    xb = jax.random.normal(kx2, (300, input_size), jnp.float32)
    yb = nn_forward(xb, w1, b1, w2, b2, block_b=128)
    jax.block_until_ready(yb)
    yb_ref = _reference(xb, w1, b1, w2, b2)
    assert yb.shape == (300, output_size)
    assert jnp.allclose(yb, yb_ref, atol=2e-5, rtol=1e-5)

    # General path (output_size > 1) sanity check.
    w1g, b1g, w2g, b2g = init_params(kp, input_size, hidden=40, output_size=4)
    yg = nn_forward(x, w1g, b1g, w2g, b2g)
    jax.block_until_ready(yg)
    yg_ref = _reference(x, w1g, b1g, w2g, b2g)
    assert yg.shape == (batch, 4)
    assert jnp.allclose(yg, yg_ref, atol=2e-5, rtol=1e-5)

    print("KERNEL_OK")
</pallas_src>

<mosaic_0001>
module attributes {stable_mosaic.version = 11 : i64} {
  func.func @_gemv_out1_kernel(%arg0: i32, %arg1: memref<8x32xf32, #tpu.memory_space<vmem>>, %arg2: memref<1x32xf32, #tpu.memory_space<vmem>>, %arg3: memref<1x1xf32, #tpu.memory_space<smem>>, %arg4: memref<1x8xf32, #tpu.memory_space<vmem>>) attributes {dimension_semantics = [#tpu.dimension_semantics<parallel>], iteration_bounds = array<i64: 1>, scalar_prefetch = 0 : i64, scratch_operands = 0 : i64, tpu.core_type = #tpu.core_type<tc>, window_params = [{transform_indices = @transform_0, window_bounds = array<i64: 8, 32>}, {pipeline_mode = #tpu.pipeline_mode<synchronous>, transform_indices = @transform_1, window_bounds = array<i64: 1, 32>}, {transform_indices = @transform_2, window_bounds = array<i64: 1, 1>}, {transform_indices = @transform_3, window_bounds = array<i64: 1, 8>}]} {
    %c0 = arith.constant 0 : index
    %c0_0 = arith.constant 0 : index
    %0 = vector.load %arg1[%c0, %c0_0] : memref<8x32xf32, #tpu.memory_space<vmem>>, vector<8x32xf32>
    %c0_1 = arith.constant 0 : index
    %c0_2 = arith.constant 0 : index
    %1 = vector.load %arg2[%c0_1, %c0_2] : memref<1x32xf32, #tpu.memory_space<vmem>>, vector<1x32xf32>
    %2 = vector.broadcast %1 : vector<1x32xf32> to vector<8x32xf32>
    %3 = arith.mulf %0, %2 : vector<8x32xf32>
    %cst = arith.constant dense<0.000000e+00> : vector<8xf32>
    %4 = vector.multi_reduction <add>, %3, %cst [1] : vector<8x32xf32> to vector<8xf32>
    %c0_3 = arith.constant 0 : index
    %c0_4 = arith.constant 0 : index
    %5 = memref.load %arg3[%c0_3, %c0_4] : memref<1x1xf32, #tpu.memory_space<smem>>
    %6 = vector.broadcast %5 : f32 to vector<8xf32>
    %7 = arith.addf %4, %6 : vector<8xf32>
    %8 = vector.shape_cast %7 : vector<8xf32> to vector<1x8xf32>
    %c0_5 = arith.constant 0 : index
    %c0_6 = arith.constant 0 : index
    %9 = vector.load %arg4[%c0_5, %c0_6] : memref<1x8xf32, #tpu.memory_space<vmem>>, vector<1x8xf32>
    tpu.vector_store %arg4[%c0_5, %c0_6], %8 {strides = array<i32>} : memref<1x8xf32, #tpu.memory_space<vmem>>, vector<1x8xf32>,
    return
  }
  func.func @transform_0(%arg0: i32) -> (i32, i32) {
    %c0_i32 = arith.constant 0 : i32
    %c0_i32_0 = arith.constant 0 : i32
    return %arg0, %c0_i32 : i32, i32
  }
  func.func @transform_1(%arg0: i32) -> (i32, i32) {
    %c0_i32 = arith.constant 0 : i32
    %c0_i32_0 = arith.constant 0 : i32
    %c0_i32_1 = arith.constant 0 : i32
    return %c0_i32, %c0_i32_0 : i32, i32
  }
  func.func @transform_2(%arg0: i32) -> (i32, i32) {
    %c0_i32 = arith.constant 0 : i32
    %c0_i32_0 = arith.constant 0 : i32
    %c0_i32_1 = arith.constant 0 : i32
    return %c0_i32, %c0_i32_0 : i32, i32
  }
  func.func @transform_3(%arg0: i32) -> (i32, i32) {
    %c0_i32 = arith.constant 0 : i32
    %c0_i32_0 = arith.constant 0 : i32
    return %c0_i32, %arg0 : i32, i32
  }
}

</mosaic_0001>

<llo_original>
// kernel: tpu_custom_call.1
$region0: #{tpu_custom_call.1}
  #allocation0 [shape = 'u32[]', space=smem, size = 0x4, offset = 0x4, fixed_abs, tag = 'smem constant byte address 0x4 - core index']
  #allocation1 [shape = 'u32[144,128]{1,0:T(1,128)}', space=vmem, size = 0x12000, scoped, tag = 'internal scratch']
  #allocation2 [shape = 'f32[1,1]{1,0:T(1,128)S(6)}', space=smem, size = 0x200, scoped, tag = 'scoped memory for tpu_custom_call.1']
  %s0 = inlined_call_operand.hbm [shape: f32[8,32], index: 0, kind: input, shape index: {}]
  %s1 = inlined_call_operand.vmem [shape: f32[1,32], index: 1, kind: input, shape index: {}]
  %s2 = inlined_call_operand.<no memory space> [shape: f32[1,1], index: 2, kind: input, shape index: {}]
  %s3 = inlined_call_operand.hbm [shape: f32[1,8], index: 3, kind: output, shape index: {}]
  %s4 = sld [smem:[#allocation0]]
  $region26: #{tpu_custom_call.1} parent=0
    _
  %s6 = ssub.s32 1, %s4
  %s7 = scalar_select 0, %s6, %s4
  %8 = sst [smem:[#allocation2]] %s2
  $region1: #{tpu_custom_call.1} parent=0
    #allocation3 [shape = 'u8[4096]{0}', space=vmem, size = 0x1000, scoped, tag = 'input window, operand 0, single buffered']
    #allocation4 [shape = 's32[1]{0}', space=sflag, size = 0x4, scoped, tag = 'scoped memory for tpu_custom_call.1']
    #allocation5 [shape = 's32[1]{0}', space=sflag, size = 0x4, scoped, tag = 'scoped memory for tpu_custom_call.1']
    #allocation6 [shape = 'u8[512]{0}', space=vmem, size = 0x400, scoped, tag = 'output window, operand 0, single buffered']
    %9 = vsyncpa [#allocation4], 0
    %10 = vsyncpa [#allocation5], 0
    // Predicated region
    $region2: #{tpu_custom_call.1} parent=1 // pred_check
      _
    $region3: #{tpu_custom_call.1} parent=1 // pred_check_branch
      %12 = sbr.rel (0) target = $region5
    $region4: #{tpu_custom_call.1} parent=1 // pred_region
      %s14 = ssub.s32 128, 128
      %15 = vsyncadd [#allocation4], %s14
      %s17 = sshll.u32 [#allocation3], 4
      %s18 = int_to_ptr.vmem [resolvable:$true] %s17
      %20 = dma.hbm_to_vmem [thread:$0]  %s0, 128, %s18, [#allocation4]
    $region5: #{tpu_custom_call.1} parent=1 // pred_fallthru
      _
    // Predicated region
    $region6: #{tpu_custom_call.1} parent=1 // pred_check
      _
    $region7: #{tpu_custom_call.1} parent=1 // pred_check_branch
      %22 = sbr.rel (0) target = $region9
    $region8: #{tpu_custom_call.1} parent=1 // pred_region
      _
    $region9: #{tpu_custom_call.1} parent=1 // pred_fallthru
      _
    // Predicated region
    $region10: #{tpu_custom_call.1} parent=1 // pred_check
      _
    $region11: #{tpu_custom_call.1} parent=1 // pred_check_branch
      %24 = sbr.rel (0) target = $region13
    $region12: #{tpu_custom_call.1} parent=1 // pred_region
      _
    $region13: #{tpu_custom_call.1} parent=1 // pred_fallthru
      _
    // Predicated region
    $region14: #{tpu_custom_call.1} parent=1 // pred_check
      _
    $region15: #{tpu_custom_call.1} parent=1 // pred_check_branch
      %26 = sbr.rel (0) target = $region17
    $region16: #{tpu_custom_call.1} parent=1 // pred_region
      %27 = dma.done [#allocation4], 128
    $region17: #{tpu_custom_call.1} parent=1 // pred_fallthru
      _
    %v28 = vld [vmem:[#allocation3] sm:$0xff]
    %v29 = vld [vmem:[%s1] sm:$0x1]
    %v31 = vlaneseq
    %v32 = vshrl.u32 %v31, 7
    %v33 = vsub.s32 0, %v32
    %v34 = vrot.slane %v29, %v33
    %v36 = vmul.f32 %v28, %v34
    %vm37 = vcmask 261120
    %v38 = vsel %vm37, %v36, 0.0
    %39 = vadd.xlane.f32.xlu0 %v38
    %v40 = vpop.xlane.xlu0 %39
    %s41 = sld [smem:[#allocation2]]
    %v42 = vstv %s41
    %v43 = vadd.f32 %v40, %v42
    %v45 = vlaneseq
    %v46 = vand.u32 %v45, 127
    %v47 = vlaneseq
    %v48 = vshrl.u32 %v47, 7
    %v49 = vsub.s32 %v46, %v48
    %v50 = vrot.slane %v43, %v49
    %vm52 = vcmask 57344
    %53 = vst.msk [vmem:[#allocation6] sm:$0x1] %vm52, %v50
    // Predicated region
    $region18: #{tpu_custom_call.1} parent=1 // pred_check
      _
    $region19: #{tpu_custom_call.1} parent=1 // pred_check_branch
      %55 = sbr.rel (0) target = $region21
    $region20: #{tpu_custom_call.1} parent=1 // pred_region
      %s57 = ssub.s32 16, 16
      %58 = vsyncadd [#allocation5], %s57
      %s60 = sshll.u32 [#allocation6], 4
      %s61 = int_to_ptr.vmem [resolvable:$true] %s60
      %63 = dma.vmem_to_hbm [thread:$0]  %s61, 16, %s3, [#allocation5]
    $region21: #{tpu_custom_call.1} parent=1 // pred_fallthru
      _
    // Predicated region
    $region22: #{tpu_custom_call.1} parent=1 // pred_check
      _
    $region23: #{tpu_custom_call.1} parent=1 // pred_check_branch
      %65 = sbr.rel (0) target = $region25
    $region24: #{tpu_custom_call.1} parent=1 // pred_region
      %66 = dma.done [#allocation5], 16
    $region25: #{tpu_custom_call.1} parent=1 // pred_fallthru
      _
    %67 = vsyncpa [#allocation4], 1
    %68 = vsyncpa [#allocation5], 1

</llo_original>
